<compile_context>
chip_gen: v6e
topology: v6e:2x2x1
jax: 0.10.0
libtpu: 0.0.40
codegen_flags: <defaults>
</compile_context>

<pallas_src>
import functools

import numpy as np
import jax
import jax.numpy as jnp
from jax.experimental import pallas as pl
from jax.experimental.pallas import tpu as pltpu


LANES = 128            # vreg lane width
MAX_SINGLE_ROWS = 512  # up to 512*128 = 65536 vocab ids handled in one block
TILE_ROWS = 512        # tile height for the multi-step (large-vocab) path


def _mil_single_kernel(probs_ref, pos_ref, neg_ref, out_ref):
    """Whole (padded) vocab row in one block: no scratch, no init/finalize."""
    p = probs_ref[...]            # (rows, 128) f32, lane/sublane dense
    pos = pos_ref[...]            # 1.0 where id is a positive (present, valid) word
    neg = neg_ref[...]            # 1.0 where id is a negative (absent, valid) word

    # One EUP log per element; argument chosen with a VPU select.
    arg = jnp.where(pos > 0.0, p + 1e-30, 1.0 - p + 1e-15)
    l = jnp.log(arg)

    log_pos = -jnp.sum(l * pos, keepdims=True)     # (1, 1)
    log_neg = -jnp.sum(l * neg, keepdims=True)
    n_pos = jnp.sum(pos, keepdims=True)            # = sum(mask_pos)
    n_neg = jnp.sum(neg, keepdims=True)            # = sum(mask_neg)
    out_ref[...] = log_pos / n_pos + log_neg / n_neg


def _mil_multi_kernel(vocab_size, probs_ref, pos_ref, neg_ref, out_ref,
                      acc_lp, acc_ln, acc_np):
    """Large-vocab path: tile the vocab reduction, per-lane partial sums."""
    step = pl.program_id(0)

    @pl.when(step == 0)
    def _init():
        acc_lp[...] = jnp.zeros_like(acc_lp)
        acc_ln[...] = jnp.zeros_like(acc_ln)
        acc_np[...] = jnp.zeros_like(acc_np)

    p = probs_ref[...]
    pos = pos_ref[...]
    neg = neg_ref[...]
    arg = jnp.where(pos > 0.0, p + 1e-30, 1.0 - p + 1e-15)
    l = jnp.log(arg)

    # Sublane (axis 0) partial reduce per step; lanes reduced once at the end.
    acc_lp[...] += jnp.sum(l * pos, axis=0, keepdims=True)   # (1, 128)
    acc_ln[...] += jnp.sum(l * neg, axis=0, keepdims=True)
    acc_np[...] += jnp.sum(pos, axis=0, keepdims=True)

    @pl.when(step == pl.num_programs(0) - 1)
    def _finalize():
        log_pos = -jnp.sum(acc_lp[...], keepdims=True)       # (1, 1)
        log_neg = -jnp.sum(acc_ln[...], keepdims=True)
        n_pos = jnp.sum(acc_np[...], keepdims=True)
        n_neg = jnp.float32(vocab_size - 1) - n_pos          # valid ids partition pos/neg
        out_ref[...] = log_pos / n_pos + log_neg / n_neg


def mil_crit(input_probs, target, vocab_size):
    """input_probs: (num_img, vocab) f32 probabilities; target: int word ids.

    Matches the PyTorch MIL_crit forward (batch_size = 1 semantics: only image
    0's probabilities are used).  Returns a scalar f32 loss.
    """
    probs = input_probs[0].astype(jnp.float32)                     # (vocab,)

    rows_needed = pl.cdiv(vocab_size, LANES)
    single = rows_needed <= MAX_SINGLE_ROWS
    if single:
        v_rows = 8 * pl.cdiv(rows_needed, 8)                       # full (8,128) vregs
    else:
        v_rows = TILE_ROWS * pl.cdiv(rows_needed, TILE_ROWS)
    v_pad = v_rows * LANES

    probs = jnp.pad(probs, (0, v_pad - vocab_size))

    # Presence row via scatter (== np.unique + set membership in the reference).
    tgt = target.reshape(-1).astype(jnp.int32)
    present = jnp.zeros((v_pad,), jnp.float32).at[tgt].max(
        jnp.ones(tgt.shape, jnp.float32))

    # Validity (null word id 0 and vocab padding excluded) baked into the masks.
    ids = jnp.arange(v_pad, dtype=jnp.int32)
    valid = jnp.logical_and(ids > 0, ids < vocab_size).astype(jnp.float32)
    pos_mask = present * valid
    neg_mask = valid - pos_mask

    probs2d = probs.reshape(v_rows, LANES)                          # lane-dense vocab
    pos2d = pos_mask.reshape(v_rows, LANES)
    neg2d = neg_mask.reshape(v_rows, LANES)

    if single:
        out = pl.pallas_call(
            _mil_single_kernel,
            out_shape=jax.ShapeDtypeStruct((1, 1), jnp.float32),
            grid=(1,),
            in_specs=[pl.BlockSpec((v_rows, LANES), lambda i: (0, 0))] * 3,
            out_specs=pl.BlockSpec((1, 1), lambda i: (0, 0)),
            compiler_params=pltpu.CompilerParams(
                dimension_semantics=("arbitrary",)),
        )(probs2d, pos2d, neg2d)
    else:
        num_tiles = v_rows // TILE_ROWS
        kernel = functools.partial(_mil_multi_kernel, vocab_size)
        out = pl.pallas_call(
            kernel,
            out_shape=jax.ShapeDtypeStruct((1, 1), jnp.float32),
            grid=(num_tiles,),
            in_specs=[pl.BlockSpec((TILE_ROWS, LANES), lambda i: (i, 0))] * 3,
            out_specs=pl.BlockSpec((1, 1), lambda i: (0, 0)),
            scratch_shapes=[pltpu.VMEM((1, LANES), jnp.float32)] * 3,
            compiler_params=pltpu.CompilerParams(
                dimension_semantics=("arbitrary",)),
        )(probs2d, pos2d, neg2d)
    return out[0, 0]


if __name__ == "__main__":
    # Shapes implied by the module: input (#images=1, vocab_size), target
    # (#images * seq_per_img, seq_length) integer word ids.
    num_img, vocab_size = 1, 2000
    seq_per_img, seq_length = 5, 8

    key = jax.random.PRNGKey(0)
    kp, kt = jax.random.split(key)
    input_probs = jax.random.uniform(kp, (num_img, vocab_size), dtype=jnp.float32,
                                     minval=1e-3, maxval=1.0 - 1e-3)
    target = jax.random.randint(kt, (num_img * seq_per_img, seq_length),
                                0, vocab_size, dtype=jnp.int32)

    out = mil_crit(input_probs, target, vocab_size)
    out = jax.block_until_ready(out)

    # Pure numpy reference mirroring the PyTorch module exactly.
    p_np = np.asarray(input_probs, dtype=np.float64)
    t_np = np.asarray(target)
    words = np.unique(t_np)
    present = set(words.tolist())
    idx_pos = words
    idx_neg = np.array([a for a in range(vocab_size) if a not in present])
    mask_pos = (idx_pos > 0).astype(np.float64)
    mask_neg = (idx_neg > 0).astype(np.float64)
    row = p_np[0]
    log_pos = -np.sum(np.log(row[idx_pos] + 1e-30) * mask_pos)
    log_neg = -np.sum(np.log(1.0 - row[idx_neg] + 1e-15) * mask_neg)
    ref = log_pos / mask_pos.sum() + log_neg / mask_neg.sum()

    assert out.shape == ()
    assert np.allclose(np.asarray(out), ref, rtol=1e-4, atol=5e-4), (float(out), ref)

    print("KERNEL_OK")
</pallas_src>

<mosaic_0001>
module attributes {stable_mosaic.version = 11 : i64} {
  func.func @_mil_single_kernel(%arg0: i32, %arg1: memref<16x128xf32, #tpu.memory_space<vmem>>, %arg2: memref<16x128xf32, #tpu.memory_space<vmem>>, %arg3: memref<16x128xf32, #tpu.memory_space<vmem>>, %arg4: memref<1x1xf32, #tpu.memory_space<vmem>>) attributes {dimension_semantics = [#tpu.dimension_semantics<arbitrary>], iteration_bounds = array<i64: 1>, scalar_prefetch = 0 : i64, scratch_operands = 0 : i64, tpu.core_type = #tpu.core_type<tc>, window_params = [{pipeline_mode = #tpu.pipeline_mode<synchronous>, transform_indices = @transform_0, window_bounds = array<i64: 16, 128>}, {pipeline_mode = #tpu.pipeline_mode<synchronous>, transform_indices = @transform_1, window_bounds = array<i64: 16, 128>}, {pipeline_mode = #tpu.pipeline_mode<synchronous>, transform_indices = @transform_2, window_bounds = array<i64: 16, 128>}, {pipeline_mode = #tpu.pipeline_mode<synchronous>, transform_indices = @transform_3, window_bounds = array<i64: 1, 1>}]} {
    %c0 = arith.constant 0 : index
    %c0_0 = arith.constant 0 : index
    %0 = vector.load %arg1[%c0, %c0_0] : memref<16x128xf32, #tpu.memory_space<vmem>>, vector<16x128xf32>
    %c0_1 = arith.constant 0 : index
    %c0_2 = arith.constant 0 : index
    %1 = vector.load %arg2[%c0_1, %c0_2] : memref<16x128xf32, #tpu.memory_space<vmem>>, vector<16x128xf32>
    %c0_3 = arith.constant 0 : index
    %c0_4 = arith.constant 0 : index
    %2 = vector.load %arg3[%c0_3, %c0_4] : memref<16x128xf32, #tpu.memory_space<vmem>>, vector<16x128xf32>
    %cst = arith.constant 0.000000e+00 : f32
    %3 = vector.broadcast %cst : f32 to vector<16x128xf32>
    %4 = arith.cmpf ogt, %1, %3 : vector<16x128xf32>
    %cst_5 = arith.constant 1.000000e-30 : f32
    %5 = vector.broadcast %cst_5 : f32 to vector<16x128xf32>
    %6 = arith.addf %0, %5 : vector<16x128xf32>
    %cst_6 = arith.constant 1.000000e+00 : f32
    %7 = vector.broadcast %cst_6 : f32 to vector<16x128xf32>
    %8 = arith.subf %7, %0 : vector<16x128xf32>
    %cst_7 = arith.constant 1.000000e-15 : f32
    %9 = vector.broadcast %cst_7 : f32 to vector<16x128xf32>
    %10 = arith.addf %8, %9 : vector<16x128xf32>
    %11 = arith.select %4, %6, %10 : vector<16x128xi1>, vector<16x128xf32>
    %12 = math.log %11 : vector<16x128xf32>
    %13 = arith.mulf %12, %1 : vector<16x128xf32>
    %14 = vector.shape_cast %13 : vector<16x128xf32> to vector<1x16x128xf32>
    %cst_8 = arith.constant dense<0.000000e+00> : vector<1xf32>
    %15 = vector.multi_reduction <add>, %14, %cst_8 [1, 2] : vector<1x16x128xf32> to vector<1xf32>
    %16 = vector.shape_cast %15 : vector<1xf32> to vector<1x1x1xf32>
    %17 = vector.extract %16[0, 0, 0] : f32 from vector<1x1x1xf32>
    %18 = vector.broadcast %17 : f32 to vector<1x1xf32>
    %cst_9 = arith.constant 0.000000e+00 : f32
    %19 = vector.broadcast %cst_9 : f32 to vector<1x1xf32>
    %20 = arith.subf %19, %18 : vector<1x1xf32>
    %21 = arith.mulf %12, %2 : vector<16x128xf32>
    %22 = vector.shape_cast %21 : vector<16x128xf32> to vector<1x16x128xf32>
    %cst_10 = arith.constant dense<0.000000e+00> : vector<1xf32>
    %23 = vector.multi_reduction <add>, %22, %cst_10 [1, 2] : vector<1x16x128xf32> to vector<1xf32>
    %24 = vector.shape_cast %23 : vector<1xf32> to vector<1x1x1xf32>
    %25 = vector.extract %24[0, 0, 0] : f32 from vector<1x1x1xf32>
    %26 = vector.broadcast %25 : f32 to vector<1x1xf32>
    %cst_11 = arith.constant 0.000000e+00 : f32
    %27 = vector.broadcast %cst_11 : f32 to vector<1x1xf32>
    %28 = arith.subf %27, %26 : vector<1x1xf32>
    %29 = vector.shape_cast %1 : vector<16x128xf32> to vector<1x16x128xf32>
    %cst_12 = arith.constant dense<0.000000e+00> : vector<1xf32>
    %30 = vector.multi_reduction <add>, %29, %cst_12 [1, 2] : vector<1x16x128xf32> to vector<1xf32>
    %31 = vector.shape_cast %30 : vector<1xf32> to vector<1x1x1xf32>
    %32 = vector.extract %31[0, 0, 0] : f32 from vector<1x1x1xf32>
    %33 = vector.broadcast %32 : f32 to vector<1x1xf32>
    %34 = vector.shape_cast %2 : vector<16x128xf32> to vector<1x16x128xf32>
    %cst_13 = arith.constant dense<0.000000e+00> : vector<1xf32>
    %35 = vector.multi_reduction <add>, %34, %cst_13 [1, 2] : vector<1x16x128xf32> to vector<1xf32>
    %36 = vector.shape_cast %35 : vector<1xf32> to vector<1x1x1xf32>
    %37 = vector.extract %36[0, 0, 0] : f32 from vector<1x1x1xf32>
    %38 = vector.broadcast %37 : f32 to vector<1x1xf32>
    %39 = arith.divf %20, %33 : vector<1x1xf32>
    %40 = arith.divf %28, %38 : vector<1x1xf32>
    %41 = arith.addf %39, %40 : vector<1x1xf32>
    %c0_14 = arith.constant 0 : index
    %c0_15 = arith.constant 0 : index
    %42 = vector.load %arg4[%c0_14, %c0_15] : memref<1x1xf32, #tpu.memory_space<vmem>>, vector<1x1xf32>
    tpu.vector_store %arg4[%c0_14, %c0_15], %41 {strides = array<i32>} : memref<1x1xf32, #tpu.memory_space<vmem>>, vector<1x1xf32>,
    return
  }
  func.func @transform_0(%arg0: i32) -> (i32, i32) {
    %c0_i32 = arith.constant 0 : i32
    %c0_i32_0 = arith.constant 0 : i32
    %c0_i32_1 = arith.constant 0 : i32
    return %c0_i32, %c0_i32_0 : i32, i32
  }
  func.func @transform_1(%arg0: i32) -> (i32, i32) {
    %c0_i32 = arith.constant 0 : i32
    %c0_i32_0 = arith.constant 0 : i32
    %c0_i32_1 = arith.constant 0 : i32
    return %c0_i32, %c0_i32_0 : i32, i32
  }
  func.func @transform_2(%arg0: i32) -> (i32, i32) {
    %c0_i32 = arith.constant 0 : i32
    %c0_i32_0 = arith.constant 0 : i32
    %c0_i32_1 = arith.constant 0 : i32
    return %c0_i32, %c0_i32_0 : i32, i32
  }
  func.func @transform_3(%arg0: i32) -> (i32, i32) {
    %c0_i32 = arith.constant 0 : i32
    %c0_i32_0 = arith.constant 0 : i32
    %c0_i32_1 = arith.constant 0 : i32
    return %c0_i32, %c0_i32_0 : i32, i32
  }
}

</mosaic_0001>

<llo_original>
// kernel: tpu_custom_call.1
$region0: #{tpu_custom_call.1}
  #allocation0 [shape = 'u32[]', space=smem, size = 0x4, offset = 0x4, fixed_abs, tag = 'smem constant byte address 0x4 - core index']
  #allocation1 [shape = 'u32[144,128]{1,0:T(1,128)}', space=vmem, size = 0x12000, scoped, tag = 'internal scratch']
  %s0 = inlined_call_operand.hbm [shape: f32[16,128], index: 0, kind: input, shape index: {}]
  %s1 = inlined_call_operand.hbm [shape: f32[16,128], index: 1, kind: input, shape index: {}]
  %s2 = inlined_call_operand.hbm [shape: f32[16,128], index: 2, kind: input, shape index: {}]
  %s3 = inlined_call_operand.hbm [shape: f32[1,1], index: 3, kind: output, shape index: {}]
  %s4 = sld [smem:[#allocation0]]
  $region34: #{tpu_custom_call.1} parent=0
    _
  %s6 = ssub.s32 1, %s4
  %s7 = scalar_select 0, %s6, %s4
  $region1: #{tpu_custom_call.1} parent=0
    #allocation2 [shape = 'u8[8192]{0}', space=vmem, size = 0x2000, scoped, tag = 'input window, operand 0, single buffered']
    #allocation3 [shape = 's32[1]{0}', space=sflag, size = 0x4, scoped, tag = 'scoped memory for tpu_custom_call.1']
    #allocation4 [shape = 's32[1]{0}', space=sflag, size = 0x4, scoped, tag = 'scoped memory for tpu_custom_call.1']
    #allocation5 [shape = 'u8[8192]{0}', space=vmem, size = 0x2000, scoped, tag = 'input window, operand 1, single buffered']
    #allocation6 [shape = 's32[1]{0}', space=sflag, size = 0x4, scoped, tag = 'scoped memory for tpu_custom_call.1']
    #allocation7 [shape = 'u8[8192]{0}', space=vmem, size = 0x2000, scoped, tag = 'input window, operand 2, single buffered']
    #allocation8 [shape = 'u8[512]{0}', space=vmem, size = 0x400, scoped, tag = 'output window, operand 0, single buffered']
    %8 = vsyncpa [#allocation3], 0
    %9 = vsyncpa [#allocation6], 0
    %10 = vsyncpa [#allocation4], 0
    // Predicated region
    $region2: #{tpu_custom_call.1} parent=1 // pred_check
      _
    $region3: #{tpu_custom_call.1} parent=1 // pred_check_branch
      %12 = sbr.rel (0) target = $region5
    $region4: #{tpu_custom_call.1} parent=1 // pred_region
      %s14 = ssub.s32 256, 256
      %15 = vsyncadd [#allocation3], %s14
      %s16 = sshll.u32 [#allocation2], 4
      %s17 = int_to_ptr.vmem [resolvable:$true] %s16
      %22 = dma.hbm_to_vmem [thread:$0]  %s0, 256, %s17, [#allocation3], 128, 128, 8
    $region5: #{tpu_custom_call.1} parent=1 // pred_fallthru
      _
    // Predicated region
    $region6: #{tpu_custom_call.1} parent=1 // pred_check
      _
    $region7: #{tpu_custom_call.1} parent=1 // pred_check_branch
      %24 = sbr.rel (0) target = $region9
    $region8: #{tpu_custom_call.1} parent=1 // pred_region
      %s26 = ssub.s32 256, 256
      %27 = vsyncadd [#allocation6], %s26
      %s28 = sshll.u32 [#allocation5], 4
      %s29 = int_to_ptr.vmem [resolvable:$true] %s28
      %34 = dma.hbm_to_vmem [thread:$0]  %s1, 256, %s29, [#allocation6], 128, 128, 8
    $region9: #{tpu_custom_call.1} parent=1 // pred_fallthru
      _
    // Predicated region
    $region10: #{tpu_custom_call.1} parent=1 // pred_check
      _
    $region11: #{tpu_custom_call.1} parent=1 // pred_check_branch
      %36 = sbr.rel (0) target = $region13
    $region12: #{tpu_custom_call.1} parent=1 // pred_region
      %s38 = ssub.s32 256, 256
      %39 = vsyncadd [#allocation6], %s38
      %s40 = sshll.u32 [#allocation7], 4
      %s41 = int_to_ptr.vmem [resolvable:$true] %s40
      %46 = dma.hbm_to_vmem [thread:$0]  %s2, 256, %s41, [#allocation6], 128, 128, 8
    $region13: #{tpu_custom_call.1} parent=1 // pred_fallthru
      _
    // Predicated region
    $region14: #{tpu_custom_call.1} parent=1 // pred_check
      _
    $region15: #{tpu_custom_call.1} parent=1 // pred_check_branch
      %48 = sbr.rel (0) target = $region17
    $region16: #{tpu_custom_call.1} parent=1 // pred_region
      %49 = dma.done [#allocation3], 256
    $region17: #{tpu_custom_call.1} parent=1 // pred_fallthru
      _
    // Predicated region
    $region18: #{tpu_custom_call.1} parent=1 // pred_check
      _
    $region19: #{tpu_custom_call.1} parent=1 // pred_check_branch
      %51 = sbr.rel (0) target = $region21
    $region20: #{tpu_custom_call.1} parent=1 // pred_region
      %52 = dma.done [#allocation6], 256
    $region21: #{tpu_custom_call.1} parent=1 // pred_fallthru
      _
    // Predicated region
    $region22: #{tpu_custom_call.1} parent=1 // pred_check
      _
    $region23: #{tpu_custom_call.1} parent=1 // pred_check_branch
      %54 = sbr.rel (0) target = $region25
    $region24: #{tpu_custom_call.1} parent=1 // pred_region
      %55 = dma.done [#allocation6], 256
    $region25: #{tpu_custom_call.1} parent=1 // pred_fallthru
      _
    %v56 = vld [vmem:[#allocation2] sm:$0xff]
    %v57 = vld [vmem:[#allocation2 + $0x8] sm:$0xff]
    %v58 = vld [vmem:[#allocation5] sm:$0xff]
    %v59 = vld [vmem:[#allocation5 + $0x8] sm:$0xff]
    %v60 = vld [vmem:[#allocation7] sm:$0xff]
    %v61 = vld [vmem:[#allocation7 + $0x8] sm:$0xff]
    %vm62 = vcmp.gt.f32.partialorder %v58, 0.0
    %vm63 = vcmp.gt.f32.partialorder %v59, 0.0
    %v64 = vadd.f32 %v56, 1e-30
    %v65 = vadd.f32 %v57, 1e-30
    %v66 = vsub.f32 1.0, %v56
    %v67 = vsub.f32 1.0, %v57
    %v68 = vadd.f32 %v66, 1e-15
    %v69 = vadd.f32 %v67, 1e-15
    %v70 = vsel %vm62, %v64, %v68
    %v71 = vsel %vm63, %v65, %v69
    %v72 = vlog2.pop %v70
    %v73 = vmul.f32 %v72, 0.6931472
    %v74 = vlog2.pop %v71
    %v75 = vmul.f32 %v74, 0.6931472
    %v76 = vmul.f32 %v73, %v58
    %v77 = vmul.f32 %v75, %v59
    %v78 = vadd.f32 %v76, %v77
    %79 = vadd.xlane.f32.xlu0 %v78
    %v80 = vpop.xlane.xlu0 %79
    %v81 = vrot.slane %v80, 4
    %v82 = vadd.f32 %v80, %v81
    %v83 = vrot.slane %v82, 2
    %v84 = vadd.f32 %v82, %v83
    %v85 = vrot.slane %v84, 1
    %v86 = vadd.f32 %v84, %v85
    %s87 = vtos %v86
    %v88 = vstv %s87
    %v89 = vsub.f32 0.0, %v88
    %v90 = vmul.f32 %v73, %v60
    %v91 = vmul.f32 %v75, %v61
    %v92 = vadd.f32 %v90, %v91
    %93 = vadd.xlane.f32.xlu0 %v92
    %v94 = vpop.xlane.xlu0 %93
    %v95 = vrot.slane %v94, 4
    %v96 = vadd.f32 %v94, %v95
    %v97 = vrot.slane %v96, 2
    %v98 = vadd.f32 %v96, %v97
    %v99 = vrot.slane %v98, 1
    %v100 = vadd.f32 %v98, %v99
    %s101 = vtos %v100
    %v102 = vstv %s101
    %v103 = vsub.f32 0.0, %v102
    %v104 = vadd.f32 %v58, %v59
    %105 = vadd.xlane.f32.xlu0 %v104
    %v106 = vpop.xlane.xlu0 %105
    %v107 = vrot.slane %v106, 4
    %v108 = vadd.f32 %v106, %v107
    %v109 = vrot.slane %v108, 2
    %v110 = vadd.f32 %v108, %v109
    %v111 = vrot.slane %v110, 1
    %v112 = vadd.f32 %v110, %v111
    %s113 = vtos %v112
    %v114 = vstv %s113
    %v115 = vadd.f32 %v60, %v61
    %116 = vadd.xlane.f32.xlu0 %v115
    %v117 = vpop.xlane.xlu0 %116
    %v118 = vrot.slane %v117, 4
    %v119 = vadd.f32 %v117, %v118
    %v120 = vrot.slane %v119, 2
    %v121 = vadd.f32 %v119, %v120
    %v122 = vrot.slane %v121, 1
    %v123 = vadd.f32 %v121, %v122
    %s124 = vtos %v123
    %v125 = vstv %s124
    %v126 = vrcp.pop %v114
    %v127 = vmul.f32 %v89, %v126
    %v128 = vrcp.pop %v125
    %v129 = vmul.f32 %v103, %v128
    %v130 = vadd.f32 %v127, %v129
    %vm131 = vcmask 0
    %132 = vst.msk [vmem:[#allocation8] sm:$0x1] %vm131, %v130
    // Predicated region
    $region26: #{tpu_custom_call.1} parent=1 // pred_check
      _
    $region27: #{tpu_custom_call.1} parent=1 // pred_check_branch
      %134 = sbr.rel (0) target = $region29
    $region28: #{tpu_custom_call.1} parent=1 // pred_region
      %s136 = ssub.s32 16, 16
      %137 = vsyncadd [#allocation4], %s136
      %s139 = sshll.u32 [#allocation8], 4
      %s140 = int_to_ptr.vmem [resolvable:$true] %s139
      %142 = dma.vmem_to_hbm [thread:$0]  %s140, 16, %s3, [#allocation4]
    $region29: #{tpu_custom_call.1} parent=1 // pred_fallthru
      _
    // Predicated region
    $region30: #{tpu_custom_call.1} parent=1 // pred_check
      _
    $region31: #{tpu_custom_call.1} parent=1 // pred_check_branch
      %144 = sbr.rel (0) target = $region33
    $region32: #{tpu_custom_call.1} parent=1 // pred_region
      %145 = dma.done [#allocation4], 16
    $region33: #{tpu_custom_call.1} parent=1 // pred_fallthru
      _
    %146 = vsyncpa [#allocation3], 1
    %147 = vsyncpa [#allocation6], 1
    %148 = vsyncpa [#allocation4], 1

</llo_original>
